<compile_context>
chip_gen: v7x
topology: tpu7x:2x2x1
jax: 0.10.0
libtpu: 0.0.40
codegen_flags: <defaults>
</compile_context>

<pallas_src>
import functools

import jax
import jax.numpy as jnp
import numpy as np
from jax import lax
from jax.experimental import pallas as pl
from jax.experimental.pallas import tpu as pltpu


# ----------------------------------------------------------------------------
# Kernel 1: plain matmul + bias (used for ConvTranspose2d(k=2, s=2)).
# ----------------------------------------------------------------------------
def _matmul_bias_kernel(x_ref, w_ref, b_ref, o_ref):
    o_ref[...] = (
        jnp.dot(x_ref[...], w_ref[...], preferred_element_type=jnp.float32)
        + b_ref[...]
    ).astype(o_ref.dtype)


def conv_transpose_2x2_s2(x_nhwc, w_ct, b_ct):
    """x_nhwc: (B,H,W,Cin); w_ct: (Cin,Cout,2,2) torch layout; b_ct: (Cout,)."""
    B, H, W, Cin = x_nhwc.shape
    Cout = w_ct.shape[1]
    xm = x_nhwc.reshape(B * H * W, Cin)
    # columns ordered (ki, kj, co)
    wm = jnp.transpose(w_ct, (0, 2, 3, 1)).reshape(Cin, 4 * Cout).astype(jnp.float32)
    bm = jnp.tile(b_ct, 4).reshape(1, 4 * Cout).astype(jnp.float32)

    y = pl.pallas_call(
        _matmul_bias_kernel,
        out_shape=jax.ShapeDtypeStruct((B * H * W, 4 * Cout), x_nhwc.dtype),
    )(xm, wm, bm)

    # interleave: out[b, 2i+ki, 2j+kj, co]
    y = y.reshape(B, H, W, 2, 2, Cout)
    y = jnp.transpose(y, (0, 1, 3, 2, 4, 5)).reshape(B, 2 * H, 2 * W, Cout)
    return y


# ----------------------------------------------------------------------------
# Kernel 2: fused  (x * attention) -> DoubleConv  on the flat padded layout.
# Rows = flattened (batch, padded H, padded W), lanes = channels.
# A 3x3 tap (dy, dx) for output row p reads input row p + dy*Wp + dx of the
# halo-extended buffer (halo = Wp + 1 zero rows front/back).
# ----------------------------------------------------------------------------
def _up_attn_double_conv_kernel(x_ref, a_ref, m_ref, w1_ref, b1_ref,
                                w2_ref, b2_ref, wid_ref, bid_ref,
                                o_ref, xa_ref, h1_ref, *, Wp, halo):
    Sq, Cout = o_ref.shape
    Cin = x_ref.shape[1]
    mask = m_ref[...]                                   # (Sq, 1) interior mask

    # attention gating in the native dtype; keep it in a VMEM scratch so the
    # nine tap windows below are plain strided VMEM reads.
    xa_ref[...] = x_ref[...] * a_ref[...]

    # ---- conv1: 3x3 (Cin -> Cout), BN folded, ReLU, zero outside interior ----
    acc = jnp.zeros((Sq, Cout), jnp.float32)
    for dy in range(3):
        for dx in range(3):
            off = dy * Wp + dx
            acc = acc + jnp.dot(xa_ref[off:off + Sq, :], w1_ref[dy * 3 + dx],
                                preferred_element_type=jnp.float32)
    h1 = jnp.maximum(acc + b1_ref[...], 0.0) * mask     # mask == zero padding

    # re-embed h1 at the halo offset so conv2 again sees zero-padded images
    h1_ref[...] = jnp.zeros(h1_ref.shape, h1_ref.dtype)
    h1_ref[halo:halo + Sq, :] = h1

    # ---- conv2: 3x3 (Cout -> Cout), BN folded, ReLU ---------------------------
    acc2 = jnp.zeros((Sq, Cout), jnp.float32)
    for dy in range(3):
        for dx in range(3):
            off = dy * Wp + dx
            acc2 = acc2 + jnp.dot(h1_ref[off:off + Sq, :], w2_ref[dy * 3 + dx],
                                  preferred_element_type=jnp.float32)
    h2 = jnp.maximum(acc2 + b2_ref[...], 0.0)

    # ---- identity branch: 1x1 conv (no bias) + BN folded ----------------------
    ident = jnp.dot(xa_ref[halo:halo + Sq, :], wid_ref[...],
                    preferred_element_type=jnp.float32) + bid_ref[...]

    o_ref[...] = jnp.maximum(h2 + ident, 0.0).astype(o_ref.dtype)


def _fold_bn(w, b, gamma, beta, mean, var, eps=1e-5):
    """Fold eval-mode BatchNorm into a conv's weight/bias (per out channel)."""
    s = gamma / jnp.sqrt(var + eps)
    w_f = w * s[:, None, None, None]
    b0 = b if b is not None else jnp.zeros_like(mean)
    b_f = (b0 - mean) * s + beta
    return w_f, b_f


def up_attention_forward(x1, x2, attention, params):
    """NCHW inputs with PyTorch parameter layouts; returns NCHW output."""
    eps = 1e-5
    dtype = x1.dtype

    # --- 1) upsample x1 with ConvTranspose2d(k=2, s=2) -------------------------
    x1_nhwc = jnp.transpose(x1, (0, 2, 3, 1))
    x1_up = conv_transpose_2x2_s2(x1_nhwc, params["up_w"], params["up_b"])

    # --- 2) pad to x2's spatial size (F.pad), concat channels ------------------
    x2_nhwc = jnp.transpose(x2, (0, 2, 3, 1))
    diffY = x2_nhwc.shape[1] - x1_up.shape[1]
    diffX = x2_nhwc.shape[2] - x1_up.shape[2]
    x1_up = jnp.pad(x1_up, ((0, 0),
                            (diffY // 2, diffY - diffY // 2),
                            (diffX // 2, diffX - diffX // 2),
                            (0, 0)))
    x_cat = jnp.concatenate([x2_nhwc, x1_up], axis=-1)      # (B, H, W, Cin)
    B, H, W, Cin = x_cat.shape

    att = jnp.broadcast_to(attention, (B, Cin, H, W))
    att_nhwc = jnp.transpose(att, (0, 2, 3, 1)).astype(dtype)

    # --- 3) fold BN into the conv weights (eval / running stats) ---------------
    w1, b1 = _fold_bn(params["conv1_w"], params["conv1_b"],
                      params["bn1_g"], params["bn1_b"],
                      params["bn1_m"], params["bn1_v"], eps)
    w2, b2 = _fold_bn(params["conv2_w"], params["conv2_b"],
                      params["bn2_g"], params["bn2_b"],
                      params["bn2_m"], params["bn2_v"], eps)
    wid, bid = _fold_bn(params["id_w"], None,
                        params["bnid_g"], params["bnid_b"],
                        params["bnid_m"], params["bnid_v"], eps)
    Cout = w1.shape[0]

    # kernel weight layouts: (9, Cin, Cout) for 3x3, (Cin, Cout) for 1x1
    w1k = jnp.transpose(w1, (2, 3, 1, 0)).reshape(9, Cin, Cout).astype(jnp.float32)
    w2k = jnp.transpose(w2, (2, 3, 1, 0)).reshape(9, Cout, Cout).astype(jnp.float32)
    widk = jnp.transpose(wid[:, :, 0, 0], (1, 0)).astype(jnp.float32)
    b1k = b1.reshape(1, Cout).astype(jnp.float32)
    b2k = b2.reshape(1, Cout).astype(jnp.float32)
    bidk = bid.reshape(1, Cout).astype(jnp.float32)

    # --- 4) flat padded layout ---------------------------------------------------
    Hp, Wp = H + 2, W + 2
    S = Hp * Wp
    Sq = B * S
    halo = Wp + 1
    Lext = Sq + 2 * halo

    pad4 = ((0, 0), (1, 1), (1, 1), (0, 0))
    x_pad = jnp.pad(x_cat, pad4)                            # zero padding for conv
    a_pad = jnp.pad(att_nhwc, pad4)                         # zeros too -> 0*0=0
    x_ext = jnp.pad(x_pad.reshape(Sq, Cin), ((halo, halo), (0, 0)))
    a_ext = jnp.pad(a_pad.reshape(Sq, Cin), ((halo, halo), (0, 0)))

    yp = jnp.arange(Hp)
    xp = jnp.arange(Wp)
    interior = (((yp >= 1) & (yp <= H))[:, None] &
                ((xp >= 1) & (xp <= W))[None, :])
    mask = jnp.tile(interior.reshape(1, S), (B, 1)).reshape(Sq, 1).astype(jnp.float32)

    itemsize = jnp.dtype(dtype).itemsize
    vmem_need = ((2 * Lext * Cin + Sq * Cout + Sq) * itemsize       # in/out/mask
                 + Lext * Cin * itemsize + Lext * Cout * 4          # scratches
                 + (w1k.size + w2k.size + widk.size + 3 * Cout) * 4)
    vmem_limit = int(min(64 << 20, max(32 << 20, 4 * vmem_need)))

    flops = 2 * Sq * (9 * Cin * Cout + 9 * Cout * Cout + Cin * Cout)
    bytes_accessed = ((2 * Lext * Cin + Sq * Cout + Sq) * itemsize
                      + (w1k.size + w2k.size + widk.size + 3 * Cout) * 4)

    kernel = functools.partial(_up_attn_double_conv_kernel, Wp=Wp, halo=halo)

    # Whole batch in one grid step (tiny working set; per-step overhead amortized).
    # TODO(synk): for large B*H*W, tile the row dimension over a grid (with the
    #             per-image halo already baked in) instead of a single block.
    out_flat = pl.pallas_call(
        kernel,
        out_shape=jax.ShapeDtypeStruct((Sq, Cout), dtype),
        grid_spec=pltpu.PrefetchScalarGridSpec(
            num_scalar_prefetch=0,
            grid=(1,),
            in_specs=[
                pl.BlockSpec((Lext, Cin), lambda i: (0, 0)),
                pl.BlockSpec((Lext, Cin), lambda i: (0, 0)),
                pl.BlockSpec((Sq, 1), lambda i: (0, 0)),
                pl.BlockSpec((9, Cin, Cout), lambda i: (0, 0, 0)),
                pl.BlockSpec((1, Cout), lambda i: (0, 0)),
                pl.BlockSpec((9, Cout, Cout), lambda i: (0, 0, 0)),
                pl.BlockSpec((1, Cout), lambda i: (0, 0)),
                pl.BlockSpec((Cin, Cout), lambda i: (0, 0)),
                pl.BlockSpec((1, Cout), lambda i: (0, 0)),
            ],
            out_specs=pl.BlockSpec((Sq, Cout), lambda i: (0, 0)),
            scratch_shapes=[
                pltpu.VMEM((Lext, Cin), dtype),          # gated input (native dtype)
                pltpu.VMEM((Lext, Cout), jnp.float32),   # re-padded conv1 output
            ],
        ),
        compiler_params=pltpu.CompilerParams(
            dimension_semantics=("arbitrary",),
            vmem_limit_bytes=vmem_limit,
        ),
        cost_estimate=pl.CostEstimate(
            flops=int(flops), transcendentals=0,
            bytes_accessed=int(bytes_accessed)),
    )(x_ext, a_ext, mask, w1k, b1k, w2k, b2k, widk, bidk)

    out_nhwc = out_flat.reshape(B, Hp, Wp, Cout)[:, 1:H + 1, 1:W + 1, :]
    return jnp.transpose(out_nhwc, (0, 3, 1, 2))            # back to NCHW


# ----------------------------------------------------------------------------
# Pure-JAX reference mirroring the PyTorch forward (eval-mode BN).
# ----------------------------------------------------------------------------
def _bn_ref(x, gamma, beta, mean, var, eps=1e-5):
    return ((x - mean[None, :, None, None])
            / jnp.sqrt(var[None, :, None, None] + eps)
            * gamma[None, :, None, None] + beta[None, :, None, None])


def _conv_ref(x, w, b=None, padding=0):
    out = lax.conv_general_dilated(
        x, w, window_strides=(1, 1),
        padding=((padding, padding), (padding, padding)),
        dimension_numbers=("NCHW", "OIHW", "NCHW"))
    if b is not None:
        out = out + b[None, :, None, None]
    return out


def up_attention_ref(x1, x2, attention, params):
    eps = 1e-5
    B, _, H1, W1 = x1.shape
    w = params["up_w"]                                       # (Cin, Co, 2, 2)
    Co = w.shape[1]
    t = jnp.einsum("bchw,cokl->bohwkl", x1, w)
    t = jnp.transpose(t, (0, 1, 2, 4, 3, 5)).reshape(B, Co, 2 * H1, 2 * W1)
    x1u = t + params["up_b"][None, :, None, None]

    diffY = x2.shape[2] - x1u.shape[2]
    diffX = x2.shape[3] - x1u.shape[3]
    x1u = jnp.pad(x1u, ((0, 0), (0, 0),
                        (diffY // 2, diffY - diffY // 2),
                        (diffX // 2, diffX - diffX // 2)))
    x = jnp.concatenate([x2, x1u], axis=1)
    x = x * attention

    h = _conv_ref(x, params["conv1_w"], params["conv1_b"], padding=1)
    h = jnp.maximum(_bn_ref(h, params["bn1_g"], params["bn1_b"],
                            params["bn1_m"], params["bn1_v"], eps), 0.0)
    h = _conv_ref(h, params["conv2_w"], params["conv2_b"], padding=1)
    h = jnp.maximum(_bn_ref(h, params["bn2_g"], params["bn2_b"],
                            params["bn2_m"], params["bn2_v"], eps), 0.0)
    idb = _conv_ref(x, params["id_w"], None, padding=0)
    idb = _bn_ref(idb, params["bnid_g"], params["bnid_b"],
                  params["bnid_m"], params["bnid_v"], eps)
    return jnp.maximum(h + idb, 0.0)


if __name__ == "__main__":
    in_channels, out_channels = 16, 16
    B, H1, W1 = 2, 8, 8                      # x1 spatial; upsampled to 16x16
    H2, W2 = 2 * H1, 2 * W1
    Chalf = in_channels // 2                 # upsample output channels
    C2 = in_channels - Chalf                 # skip-connection channels

    key = jax.random.PRNGKey(0)
    ks = jax.random.split(key, 20)

    x1 = jax.random.normal(ks[0], (B, in_channels, H1, W1), jnp.float32)
    x2 = jax.random.normal(ks[1], (B, C2, H2, W2), jnp.float32)
    attention = jax.nn.sigmoid(
        jax.random.normal(ks[2], (B, in_channels, H2, W2), jnp.float32))

    def he(k, shape, fan_in):
        return jax.random.normal(k, shape, jnp.float32) * (1.0 / np.sqrt(fan_in))

    params = dict(
        up_w=he(ks[3], (in_channels, Chalf, 2, 2), in_channels * 4),
        up_b=he(ks[4], (Chalf,), in_channels * 4),
        conv1_w=he(ks[5], (out_channels, in_channels, 3, 3), in_channels * 9),
        conv1_b=he(ks[6], (out_channels,), in_channels * 9),
        bn1_g=1.0 + 0.1 * jax.random.normal(ks[7], (out_channels,), jnp.float32),
        bn1_b=0.1 * jax.random.normal(ks[8], (out_channels,), jnp.float32),
        bn1_m=0.1 * jax.random.normal(ks[9], (out_channels,), jnp.float32),
        bn1_v=jnp.abs(1.0 + 0.1 * jax.random.normal(ks[10], (out_channels,), jnp.float32)),
        conv2_w=he(ks[11], (out_channels, out_channels, 3, 3), out_channels * 9),
        conv2_b=he(ks[12], (out_channels,), out_channels * 9),
        bn2_g=1.0 + 0.1 * jax.random.normal(ks[13], (out_channels,), jnp.float32),
        bn2_b=0.1 * jax.random.normal(ks[14], (out_channels,), jnp.float32),
        bn2_m=0.1 * jax.random.normal(ks[15], (out_channels,), jnp.float32),
        bn2_v=jnp.abs(1.0 + 0.1 * jax.random.normal(ks[16], (out_channels,), jnp.float32)),
        id_w=he(ks[17], (out_channels, in_channels, 1, 1), in_channels),
        bnid_g=1.0 + 0.1 * jax.random.normal(ks[18], (out_channels,), jnp.float32),
        bnid_b=0.1 * jax.random.normal(ks[19], (out_channels,), jnp.float32),
        bnid_m=jnp.zeros((out_channels,), jnp.float32),
        bnid_v=jnp.ones((out_channels,), jnp.float32),
    )

    out = up_attention_forward(x1, x2, attention, params)
    out = jax.block_until_ready(out)

    ref = up_attention_ref(x1, x2, attention, params)
    np.testing.assert_allclose(np.asarray(out), np.asarray(ref),
                               rtol=1e-3, atol=1e-3)

    print("KERNEL_OK")
</pallas_src>

<mosaic_0001>
module attributes {stable_mosaic.version = 11 : i64} {
  func.func @_matmul_bias_kernel(%arg0: memref<128x16xf32, #tpu.memory_space<vmem>>, %arg1: memref<16x32xf32, #tpu.memory_space<vmem>>, %arg2: memref<1x32xf32, #tpu.memory_space<vmem>>, %arg3: memref<128x32xf32, #tpu.memory_space<vmem>>) attributes {dimension_semantics = [], scalar_prefetch = 0 : i64, scratch_operands = 0 : i64, tpu.core_type = #tpu.core_type<tc>} {
    %c0 = arith.constant 0 : index
    %c0_0 = arith.constant 0 : index
    %0 = vector.load %arg0[%c0, %c0_0] : memref<128x16xf32, #tpu.memory_space<vmem>>, vector<128x16xf32>
    %c0_1 = arith.constant 0 : index
    %c0_2 = arith.constant 0 : index
    %1 = vector.load %arg1[%c0_1, %c0_2] : memref<16x32xf32, #tpu.memory_space<vmem>>, vector<16x32xf32>
    %cst = arith.constant dense<0.000000e+00> : vector<128x32xf32>
    %2 = tpu.matmul %0, %1, %cst {dimension_numbers = #tpu.dot_dimension_numbers<[1], [0], [0], [1], [0, 0, 1, 1], [], []>} : vector<128x16xf32>, vector<16x32xf32>, vector<128x32xf32> -> vector<128x32xf32>
    %c0_3 = arith.constant 0 : index
    %c0_4 = arith.constant 0 : index
    %3 = vector.load %arg2[%c0_3, %c0_4] : memref<1x32xf32, #tpu.memory_space<vmem>>, vector<1x32xf32>
    %4 = vector.broadcast %3 : vector<1x32xf32> to vector<128x32xf32>
    %5 = arith.addf %2, %4 : vector<128x32xf32>
    %c0_5 = arith.constant 0 : index
    %c0_6 = arith.constant 0 : index
    %6 = vector.load %arg3[%c0_5, %c0_6] : memref<128x32xf32, #tpu.memory_space<vmem>>, vector<128x32xf32>
    tpu.vector_store %arg3[%c0_5, %c0_6], %5 {strides = array<i32>} : memref<128x32xf32, #tpu.memory_space<vmem>>, vector<128x32xf32>,
    return
  }
}

</mosaic_0001>

<llo_original>
// kernel: tpu_custom_call.1
$region0: #{tpu_custom_call.1}
  #allocation0 [shape = 'u32[]', space=smem, size = 0x4, offset = 0x4, fixed_abs, tag = 'smem constant byte address 0x4 - core index']
  #allocation1 [shape = 'u32[144,128]{1,0:T(1,128)}', space=vmem, size = 0x12000, scoped, tag = 'internal scratch']
  %s0 = inlined_call_operand.vmem [shape: f32[128,16], index: 0, kind: input, shape index: {}]
  %s1 = inlined_call_operand.vmem [shape: f32[16,32], index: 1, kind: input, shape index: {}]
  %s2 = inlined_call_operand.vmem [shape: f32[1,32], index: 2, kind: input, shape index: {}]
  %s3 = inlined_call_operand.vmem [shape: f32[128,32], index: 3, kind: output, shape index: {}]
  %s4 = sld [smem:[#allocation0]]
  $region22: #{tpu_custom_call.1} parent=0
    _
  %s6 = ssub.s32 1, %s4
  %s7 = scalar_select 0, %s6, %s4
  // Predicated region
  $region2: #{tpu_custom_call.1} parent=0 // pred_check
    _
  $region3: #{tpu_custom_call.1} parent=0 // pred_check_branch
    %9 = sbr.rel (0) target = $region5
  $region4: #{tpu_custom_call.1} parent=0 // pred_region
    _
  $region5: #{tpu_custom_call.1} parent=0 // pred_fallthru
    _
  // Predicated region
  $region6: #{tpu_custom_call.1} parent=0 // pred_check
    _
  $region7: #{tpu_custom_call.1} parent=0 // pred_check_branch
    %11 = sbr.rel (0) target = $region9
  $region8: #{tpu_custom_call.1} parent=0 // pred_region
    _
  $region9: #{tpu_custom_call.1} parent=0 // pred_fallthru
    _
  // Predicated region
  $region10: #{tpu_custom_call.1} parent=0 // pred_check
    _
  $region11: #{tpu_custom_call.1} parent=0 // pred_check_branch
    %13 = sbr.rel (0) target = $region13
  $region12: #{tpu_custom_call.1} parent=0 // pred_region
    _
  $region13: #{tpu_custom_call.1} parent=0 // pred_fallthru
    _
  %v14 = vld [vmem:[%s0] sm:$0xff]
  %v15 = vld [vmem:[%s0 + $0x8] sm:$0xff]
  %v16 = vld [vmem:[%s0 + $0x10] sm:$0xff]
  %v17 = vld [vmem:[%s0 + $0x18] sm:$0xff]
  %v18 = vld [vmem:[%s0 + $0x20] sm:$0xff]
  %v19 = vld [vmem:[%s0 + $0x28] sm:$0xff]
  %v20 = vld [vmem:[%s0 + $0x30] sm:$0xff]
  %v21 = vld [vmem:[%s0 + $0x38] sm:$0xff]
  %v22 = vld [vmem:[%s0 + $0x40] sm:$0xff]
  %v23 = vld [vmem:[%s0 + $0x48] sm:$0xff]
  %v24 = vld [vmem:[%s0 + $0x50] sm:$0xff]
  %v25 = vld [vmem:[%s0 + $0x58] sm:$0xff]
  %v26 = vld [vmem:[%s0 + $0x60] sm:$0xff]
  %v27 = vld [vmem:[%s0 + $0x68] sm:$0xff]
  %v28 = vld [vmem:[%s0 + $0x70] sm:$0xff]
  %v29 = vld [vmem:[%s0 + $0x78] sm:$0xff]
  %v30 = vld [vmem:[%s1] sm:$0xff]
  %v31 = vld [vmem:[%s1 + $0x8] sm:$0xff]
  %v32 = vld [vmem:[%s2] sm:$0x1]
  %v34 = vlaneseq
  %v35 = vshrl.u32 %v34, 7
  %v36 = vsub.s32 0, %v35
  %v37 = vrot.slane %v32, %v36
  %vm39 = vcmask 130048
  %v41 = vsel %vm39, %v14, 0
  %v44 = vsel %vm39, %v15, 0
  %v47 = vsel %vm39, %v16, 0
  %v50 = vsel %vm39, %v17, 0
  %v53 = vsel %vm39, %v18, 0
  %v56 = vsel %vm39, %v19, 0
  %v59 = vsel %vm39, %v20, 0
  %v62 = vsel %vm39, %v21, 0
  %v65 = vsel %vm39, %v22, 0
  %v68 = vsel %vm39, %v23, 0
  %v71 = vsel %vm39, %v24, 0
  %v74 = vsel %vm39, %v25, 0
  %v77 = vsel %vm39, %v26, 0
  %v80 = vsel %vm39, %v27, 0
  %v83 = vsel %vm39, %v28, 0
  %v86 = vsel %vm39, %v29, 0
  %88 = vmatprep.subr.mxu0 0.0
  %89 = vmatpush1.msra.mxu0 %v30
  %90 = vmatprep.subr.mxu0 0.0
  %91 = vmatpush1.msra.mxu0 %v31
  %92 = vmatprep.subr.mxu0 0.0
  %93 = vmatpush1.msra.mxu0 0.0
  %94 = vmatprep.subr.mxu0 0.0
  %95 = vmatpush1.msra.mxu0 0.0
  %96 = vmatprep.subr.mxu0 0.0
  %97 = vmatpush1.msra.mxu0 0.0
  %98 = vmatprep.subr.mxu0 0.0
  %99 = vmatpush1.msra.mxu0 0.0
  %100 = vmatprep.subr.mxu0 0.0
  %101 = vmatpush1.msra.mxu0 0.0
  %102 = vmatprep.subr.mxu0 0.0
  %103 = vmatpush1.msra.mxu0 0.0
  %104 = vmatprep.subr.mxu0 0.0
  %105 = vmatpush1.msra.mxu0 0.0
  %106 = vmatprep.subr.mxu0 0.0
  %107 = vmatpush1.msra.mxu0 0.0
  %108 = vmatprep.subr.mxu0 0.0
  %109 = vmatpush1.msra.mxu0 0.0
  %110 = vmatprep.subr.mxu0 0.0
  %111 = vmatpush1.msra.mxu0 0.0
  %112 = vmatprep.subr.mxu0 0.0
  %113 = vmatpush1.msra.mxu0 0.0
  %114 = vmatprep.subr.mxu0 0.0
  %115 = vmatpush1.msra.mxu0 0.0
  %116 = vmatprep.subr.mxu0 0.0
  %117 = vmatpush1.msra.mxu0 0.0
  %118 = vmatprep.subr.mxu0 0.0
  %119 = vmatpush1.msra.mxu0 0.0
  %120 = vmatprep.subr.mxu0 0.0
  %121 = vmatpush1.msra.mxu0 0.0
  %122 = vmatprep.subr.mxu0 0.0
  %123 = vmatpush1.msra.mxu0 0.0
  %124 = vmatprep.subr.mxu0 0.0
  %125 = vmatpush1.msra.mxu0 0.0
  %126 = vmatprep.subr.mxu0 0.0
  %127 = vmatpush1.msra.mxu0 0.0
  %128 = vmatprep.subr.mxu0 0.0
  %129 = vmatpush1.msra.mxu0 0.0
  %130 = vmatprep.subr.mxu0 0.0
  %131 = vmatpush1.msra.mxu0 0.0
  %132 = vmatprep.subr.mxu0 0.0
  %133 = vmatpush1.msra.mxu0 0.0
  %134 = vmatprep.subr.mxu0 0.0
  %135 = vmatpush1.msra.mxu0 0.0
  %136 = vmatprep.subr.mxu0 0.0
  %137 = vmatpush1.msra.mxu0 0.0
  %138 = vmatprep.subr.mxu0 0.0
  %139 = vmatpush1.msra.mxu0 0.0
  %140 = vmatprep.subr.mxu0 0.0
  %141 = vmatpush1.msra.mxu0 0.0
  %142 = vmatprep.subr.mxu0 0.0
  %143 = vmatpush1.msra.mxu0 0.0
  %144 = vmatprep.subr.mxu0 0.0
  %145 = vmatpush1.msra.mxu0 0.0
  %146 = vmatprep.subr.mxu0 0.0
  %147 = vmatpush1.msra.mxu0 0.0
  %148 = vmatprep.subr.mxu0 0.0
  %149 = vmatpush1.msra.mxu0 0.0
  %150 = vmatprep.subr.mxu0 0.0
  %151 = vmatpush1.msra.mxu0 0.0
  %152 = vmatprep.mubr.f32.mxu0 0.0
  %153 = vmatmul.mubr.f32.gmra.mrb[0].mxu0 %v41
  %v154 = vpop.f32.mrb[0].mxu0
  %v155 = vadd.f32 %v37, %v154
  %v156 = vpop.f32.mrb[0].mxu0
  %157 = vmatprep.mubr.f32.mxu0 0.0
  %158 = vmatmul.mubr.f32.gmra.mrb[0].mxu0 %v44
  %v159 = vpop.f32.mrb[0].mxu0
  %v160 = vadd.f32 %v37, %v159
  %v161 = vpop.f32.mrb[0].mxu0
  %162 = vmatprep.mubr.f32.mxu0 0.0
  %163 = vmatmul.mubr.f32.gmra.mrb[0].mxu0 %v47
  %v164 = vpop.f32.mrb[0].mxu0
  %v165 = vadd.f32 %v37, %v164
  %v166 = vpop.f32.mrb[0].mxu0
  %167 = vmatprep.mubr.f32.mxu0 0.0
  %168 = vmatmul.mubr.f32.gmra.mrb[0].mxu0 %v50
  %v169 = vpop.f32.mrb[0].mxu0
  %v170 = vadd.f32 %v37, %v169
  %v171 = vpop.f32.mrb[0].mxu0
  %172 = vmatprep.mubr.f32.mxu0 0.0
  %173 = vmatmul.mubr.f32.gmra.mrb[0].mxu0 %v53
  %v174 = vpop.f32.mrb[0].mxu0
  %v175 = vadd.f32 %v37, %v174
  %v176 = vpop.f32.mrb[0].mxu0
  %177 = vmatprep.mubr.f32.mxu0 0.0
  %178 = vmatmul.mubr.f32.gmra.mrb[0].mxu0 %v56
  %v179 = vpop.f32.mrb[0].mxu0
  %v180 = vadd.f32 %v37, %v179
  %v181 = vpop.f32.mrb[0].mxu0
  %182 = vmatprep.mubr.f32.mxu0 0.0
  %183 = vmatmul.mubr.f32.gmra.mrb[0].mxu0 %v59
  %v184 = vpop.f32.mrb[0].mxu0
  %v185 = vadd.f32 %v37, %v184
  %v186 = vpop.f32.mrb[0].mxu0
  %187 = vmatprep.mubr.f32.mxu0 0.0
  %188 = vmatmul.mubr.f32.gmra.mrb[0].mxu0 %v62
  %v189 = vpop.f32.mrb[0].mxu0
  %v190 = vadd.f32 %v37, %v189
  %v191 = vpop.f32.mrb[0].mxu0
  %192 = vmatprep.mubr.f32.mxu0 0.0
  %193 = vmatmul.mubr.f32.gmra.mrb[0].mxu0 %v65
  %v194 = vpop.f32.mrb[0].mxu0
  %v195 = vadd.f32 %v37, %v194
  %v196 = vpop.f32.mrb[0].mxu0
  %197 = vmatprep.mubr.f32.mxu0 0.0
  %198 = vmatmul.mubr.f32.gmra.mrb[0].mxu0 %v68
  %v199 = vpop.f32.mrb[0].mxu0
  %v200 = vadd.f32 %v37, %v199
  %v201 = vpop.f32.mrb[0].mxu0
  %202 = vmatprep.mubr.f32.mxu0 0.0
  %203 = vmatmul.mubr.f32.gmra.mrb[0].mxu0 %v71
  %v204 = vpop.f32.mrb[0].mxu0
  %v205 = vadd.f32 %v37, %v204
  %v206 = vpop.f32.mrb[0].mxu0
  %207 = vmatprep.mubr.f32.mxu0 0.0
  %208 = vmatmul.mubr.f32.gmra.mrb[0].mxu0 %v74
  %v209 = vpop.f32.mrb[0].mxu0
  %v210 = vadd.f32 %v37, %v209
  %v211 = vpop.f32.mrb[0].mxu0
  %212 = vmatprep.mubr.f32.mxu0 0.0
  %213 = vmatmul.mubr.f32.gmra.mrb[0].mxu0 %v77
  %v214 = vpop.f32.mrb[0].mxu0
  %v215 = vadd.f32 %v37, %v214
  %v216 = vpop.f32.mrb[0].mxu0
  %217 = vmatprep.mubr.f32.mxu0 0.0
  %218 = vmatmul.mubr.f32.gmra.mrb[0].mxu0 %v80
  %v219 = vpop.f32.mrb[0].mxu0
  %v220 = vadd.f32 %v37, %v219
  %v221 = vpop.f32.mrb[0].mxu0
  %222 = vmatprep.mubr.f32.mxu0 0.0
  %223 = vmatmul.mubr.f32.gmra.mrb[0].mxu0 %v83
  %v224 = vpop.f32.mrb[0].mxu0
  %v225 = vadd.f32 %v37, %v224
  %v226 = vpop.f32.mrb[0].mxu0
  %227 = vmatprep.mubr.f32.mxu0 0.0
  %228 = vmatmul.mubr.f32.gmra.mrb[0].mxu0 %v86
  %v229 = vpop.f32.mrb[0].mxu0
  %v230 = vadd.f32 %v37, %v229
  %v231 = vpop.f32.mrb[0].mxu0
  %232 = vdwg.mxu0
  %vm233 = vcmask 261120
  %234 = vst.msk [vmem:[%s3] sm:$0xff] %vm233, %v155
  %235 = vst.msk [vmem:[%s3 + $0x8] sm:$0xff] %vm233, %v160
  %236 = vst.msk [vmem:[%s3 + $0x10] sm:$0xff] %vm233, %v165
  %237 = vst.msk [vmem:[%s3 + $0x18] sm:$0xff] %vm233, %v170
  %238 = vst.msk [vmem:[%s3 + $0x20] sm:$0xff] %vm233, %v175
  %239 = vst.msk [vmem:[%s3 + $0x28] sm:$0xff] %vm233, %v180
  %240 = vst.msk [vmem:[%s3 + $0x30] sm:$0xff] %vm233, %v185
  %241 = vst.msk [vmem:[%s3 + $0x38] sm:$0xff] %vm233, %v190
  %242 = vst.msk [vmem:[%s3 + $0x40] sm:$0xff] %vm233, %v195
  %243 = vst.msk [vmem:[%s3 + $0x48] sm:$0xff] %vm233, %v200
  %244 = vst.msk [vmem:[%s3 + $0x50] sm:$0xff] %vm233, %v205
  %245 = vst.msk [vmem:[%s3 + $0x58] sm:$0xff] %vm233, %v210
  %246 = vst.msk [vmem:[%s3 + $0x60] sm:$0xff] %vm233, %v215
  %247 = vst.msk [vmem:[%s3 + $0x68] sm:$0xff] %vm233, %v220
  %248 = vst.msk [vmem:[%s3 + $0x70] sm:$0xff] %vm233, %v225
  %249 = vst.msk [vmem:[%s3 + $0x78] sm:$0xff] %vm233, %v230
  // Predicated region
  $region14: #{tpu_custom_call.1} parent=0 // pred_check
    _
  $region15: #{tpu_custom_call.1} parent=0 // pred_check_branch
    %251 = sbr.rel (0) target = $region17
  $region16: #{tpu_custom_call.1} parent=0 // pred_region
    _
  $region17: #{tpu_custom_call.1} parent=0 // pred_fallthru
    _
  // Predicated region
  $region18: #{tpu_custom_call.1} parent=0 // pred_check
    _
  $region19: #{tpu_custom_call.1} parent=0 // pred_check_branch
    %253 = sbr.rel (0) target = $region21
  $region20: #{tpu_custom_call.1} parent=0 // pred_region
    _
  $region21: #{tpu_custom_call.1} parent=0 // pred_fallthru
    _

</llo_original>
